<compile_context>
chip_gen: v7x
topology: tpu7x:2x2x1
jax: 0.10.0
libtpu: 0.0.40
codegen_flags: <defaults>
</compile_context>

<pallas_src>
import functools

import jax
import jax.numpy as jnp
from jax.experimental import pallas as pl
from jax.experimental.pallas import tpu as pltpu


_LANE = 128
_WOUT_TILE = 256          # output-lane tile when the full width is too wide
_MAX_FULL_WOUT = 512      # keep the whole width in one block at/below this


def _round_up(a: int, b: int) -> int:
    return (a + b - 1) // b * b


def _chip_budgets():
    """(target input-block bytes, scoped VMEM limit) for the local TPU."""
    try:
        vmem_cap = int(pltpu.get_tpu_info().vmem_capacity_bytes)
    except Exception:
        vmem_cap = 0
    if vmem_cap >= 100 * 1024 * 1024:            # v5e / v6e: 128 MiB VMEM
        return 8 * 1024 * 1024, 64 * 1024 * 1024
    return 4 * 1024 * 1024, 32 * 1024 * 1024     # v7x (64 MiB / TC) or unknown


def _psf_kernel(wlane_ref, smat_ref, x_ref, o_ref, *, scale, tor):
    # wlane_ref: VMEM (scale, 1, BW) f32 -- wlane[kh, 0, w] = W[kh, w % scale]
    # smat_ref : VMEM (BW, BWout)    f32 -- 0/1 selection, smat[w, w//scale] = 1
    # x_ref    : VMEM (tor*scale, BW)    -- native-layout input rows
    # o_ref    : VMEM (tor, BWout)       -- output rows
    parts = []
    for kh in range(scale):
        if scale == 1:
            rows = x_ref[pl.ds(kh, tor), :]
        else:
            rows = x_ref[pl.ds(kh, tor, stride=scale), :]     # sublane-strided load
        parts.append(rows.astype(jnp.float32) * wlane_ref[kh])
    # Pairwise tree-sum: shortens the VALU dependency chain (no f32 FMA on v5e/v6e).
    while len(parts) > 1:
        nxt = [parts[i] + parts[i + 1] for i in range(0, len(parts) - 1, 2)]
        if len(parts) % 2:
            nxt.append(parts[-1])
        parts = nxt
    t = parts[0]
    # kw de-interleave: one MXU matmul against the resident 0/1 selection matrix.
    out = jnp.dot(t, smat_ref[...], preferred_element_type=jnp.float32,
                  precision=jax.lax.Precision.HIGHEST)
    o_ref[...] = out.astype(o_ref.dtype)


@functools.partial(jax.jit, static_argnames=("scale",))
def psf_forward(x, weight, *, scale):
    """x: (B, C, H, W); weight: (1, 1, scale, scale). Returns (B, C, H//s, W//s)."""
    B, C, H, W = x.shape
    s = scale
    Hout, Wout = H // s, W // s
    if Hout == 0 or Wout == 0:                       # degenerate-input guard
        return jnp.zeros((B, C, Hout, Wout), x.dtype)

    if H != Hout * s:
        # Rare non-divisible height: trim so rows fuse cleanly across images.
        # TODO(synk): a per-image 3-D grid would avoid this (small) extra copy.
        x = x[:, :, : Hout * s, :]
        H = Hout * s

    R, Rout = B * C * H, B * C * Hout
    x2 = x.reshape(R, W)                             # free view, native layout

    itemsize = jnp.dtype(x.dtype).itemsize
    target_block_bytes, vmem_limit = _chip_budgets()

    # ---- Width tiling -------------------------------------------------------
    if Wout <= _MAX_FULL_WOUT:
        bw, bwout, grid_w = W, Wout, 1               # whole width in one block
    else:
        bwout = _WOUT_TILE
        bw = bwout * s
        grid_w = pl.cdiv(Wout, bwout)

    # ---- Row tiling: balanced cdiv grid, >= 2 steps for v7x's two TCs --------
    row_align = max(8, 32 // itemsize)               # (8/16/32, 128) tile rule
    bw_pad = _round_up(bw, _LANE)                    # account for lane padding
    tor_target = max(row_align,
                     target_block_bytes // max(1, bw_pad * s * itemsize))
    min_blocks = 1 if (grid_w >= 2 or Rout <= row_align) else 2
    n_blocks = max(min_blocks, pl.cdiv(Rout, tor_target))
    tor = _round_up(pl.cdiv(Rout, n_blocks), row_align)
    grid_r = pl.cdiv(Rout, tor)
    br = tor * s

    # ---- Resident tap tensors (tiny, constant index_map -> loaded once) ------
    w2 = weight.reshape(s, s).astype(jnp.float32)
    wlane = w2[:, jnp.arange(bw) % s].reshape(s, 1, bw)     # lane-periodic taps
    smat = (jnp.arange(bw)[:, None] // s ==
            jnp.arange(bwout)[None, :]).astype(jnp.float32)  # 0/1 selection

    out2 = pl.pallas_call(
        functools.partial(_psf_kernel, scale=s, tor=tor),
        out_shape=jax.ShapeDtypeStruct((Rout, Wout), x.dtype),
        grid=(grid_r, grid_w),
        in_specs=[
            pl.BlockSpec((s, 1, bw), lambda j, k: (0, 0, 0)),   # taps (resident)
            pl.BlockSpec((bw, bwout), lambda j, k: (0, 0)),     # selector (resident)
            pl.BlockSpec((br, bw), lambda j, k: (j, k)),        # input rows
        ],
        out_specs=pl.BlockSpec((tor, bwout), lambda j, k: (j, k)),
        compiler_params=pltpu.CompilerParams(
            dimension_semantics=("parallel", "parallel"),
            vmem_limit_bytes=vmem_limit,
        ),
    )(wlane, smat, x2)

    return out2.reshape(B, C, Hout, Wout)


def _reference(x, weight, scale):
    B, C, H, W = x.shape
    Hout, Wout = H // scale, W // scale
    xr = x[:, :, : Hout * scale, : Wout * scale].reshape(
        B, C, Hout, scale, Wout, scale)
    return jnp.einsum("bchpwq,pq->bchw", xr, weight.reshape(scale, scale))


if __name__ == "__main__":
    key = jax.random.PRNGKey(0)
    kx, kw = jax.random.split(key)

    scale = 2
    B, C, H, W = 2, 4, 16, 16

    x = jax.random.normal(kx, (B, C, H, W), dtype=jnp.float32)
    # Deterministic init of the conv weight (shape from nn.Conv2d(1, 1, s, s)).
    fan_in = scale * scale
    bound = 1.0 / (fan_in ** 0.5)
    weight = jax.random.uniform(
        kw, (1, 1, scale, scale), dtype=jnp.float32, minval=-bound, maxval=bound
    )

    out = psf_forward(x, weight, scale=scale)
    out = jax.block_until_ready(out)

    ref = _reference(x, weight, scale)
    assert out.shape == (B, C, H // scale, W // scale)
    # Tolerance leaves headroom for the MXU's multi-pass f32 rounding; semantic
    # errors (wrong tap / row / column) would be O(0.1-1).
    err = float(jnp.max(jnp.abs(out - ref)))
    assert jnp.allclose(out, ref, atol=2e-2, rtol=2e-2), err

    print("KERNEL_OK")
</pallas_src>

<mosaic_0001>
module attributes {stable_mosaic.version = 11 : i64} {
  func.func @_psf_kernel(%arg0: i32, %arg1: i32, %arg2: memref<2x1x16xf32, #tpu.memory_space<vmem>>, %arg3: memref<16x8xf32, #tpu.memory_space<vmem>>, %arg4: memref<64x16xf32, #tpu.memory_space<vmem>>, %arg5: memref<32x8xf32, #tpu.memory_space<vmem>>) attributes {dimension_semantics = [#tpu.dimension_semantics<parallel>, #tpu.dimension_semantics<parallel>], iteration_bounds = array<i64: 2, 1>, scalar_prefetch = 0 : i64, scratch_operands = 0 : i64, tpu.core_type = #tpu.core_type<tc>, window_params = [{pipeline_mode = #tpu.pipeline_mode<synchronous>, transform_indices = @transform_0, window_bounds = array<i64: 2, 1, 16>}, {pipeline_mode = #tpu.pipeline_mode<synchronous>, transform_indices = @transform_1, window_bounds = array<i64: 16, 8>}, {transform_indices = @transform_2, window_bounds = array<i64: 64, 16>}, {transform_indices = @transform_3, window_bounds = array<i64: 32, 8>}]} {
    %c0 = arith.constant 0 : index
    %c0_0 = arith.constant 0 : index
    %0 = tpu.strided_load %arg4[%c0, %c0_0] {strides = array<i32: 2, 1>} : memref<64x16xf32, #tpu.memory_space<vmem>>, vector<32x16xf32>
    %c0_1 = arith.constant 0 : index
    %c0_2 = arith.constant 0 : index
    %c0_3 = arith.constant 0 : index
    %1 = vector.load %arg2[%c0_1, %c0_2, %c0_3] : memref<2x1x16xf32, #tpu.memory_space<vmem>>, vector<1x1x16xf32>
    %2 = vector.shape_cast %1 : vector<1x1x16xf32> to vector<1x16xf32>
    %3 = vector.broadcast %2 : vector<1x16xf32> to vector<32x16xf32>
    %4 = arith.mulf %0, %3 : vector<32x16xf32>
    %c1 = arith.constant 1 : index
    %c0_4 = arith.constant 0 : index
    %5 = tpu.strided_load %arg4[%c1, %c0_4] {strides = array<i32: 2, 1>} : memref<64x16xf32, #tpu.memory_space<vmem>>, vector<32x16xf32>
    %c1_5 = arith.constant 1 : index
    %c0_6 = arith.constant 0 : index
    %c0_7 = arith.constant 0 : index
    %6 = vector.load %arg2[%c1_5, %c0_6, %c0_7] : memref<2x1x16xf32, #tpu.memory_space<vmem>>, vector<1x1x16xf32>
    %7 = vector.shape_cast %6 : vector<1x1x16xf32> to vector<1x16xf32>
    %8 = vector.broadcast %7 : vector<1x16xf32> to vector<32x16xf32>
    %9 = arith.mulf %5, %8 : vector<32x16xf32>
    %10 = arith.addf %4, %9 : vector<32x16xf32>
    %c0_8 = arith.constant 0 : index
    %c0_9 = arith.constant 0 : index
    %11 = vector.load %arg3[%c0_8, %c0_9] : memref<16x8xf32, #tpu.memory_space<vmem>>, vector<16x8xf32>
    %cst = arith.constant dense<0.000000e+00> : vector<32x8xf32>
    %12 = tpu.matmul %10, %11, %cst {dimension_numbers = #tpu.dot_dimension_numbers<[1], [0], [0], [1], [0, 0, 1, 1], [], []>, precision = #tpu.contract_precision<fp32>} : vector<32x16xf32>, vector<16x8xf32>, vector<32x8xf32> -> vector<32x8xf32>
    %c0_10 = arith.constant 0 : index
    %c0_11 = arith.constant 0 : index
    %13 = vector.load %arg5[%c0_10, %c0_11] : memref<32x8xf32, #tpu.memory_space<vmem>>, vector<32x8xf32>
    tpu.vector_store %arg5[%c0_10, %c0_11], %12 {strides = array<i32>} : memref<32x8xf32, #tpu.memory_space<vmem>>, vector<32x8xf32>,
    return
  }
  func.func @transform_0(%arg0: i32, %arg1: i32) -> (i32, i32, i32) {
    %c0_i32 = arith.constant 0 : i32
    %c0_i32_0 = arith.constant 0 : i32
    %c0_i32_1 = arith.constant 0 : i32
    %c0_i32_2 = arith.constant 0 : i32
    return %c0_i32, %c0_i32_0, %c0_i32_1 : i32, i32, i32
  }
  func.func @transform_1(%arg0: i32, %arg1: i32) -> (i32, i32) {
    %c0_i32 = arith.constant 0 : i32
    %c0_i32_0 = arith.constant 0 : i32
    %c0_i32_1 = arith.constant 0 : i32
    return %c0_i32, %c0_i32_0 : i32, i32
  }
  func.func @transform_2(%arg0: i32, %arg1: i32) -> (i32, i32) {
    %c0_i32 = arith.constant 0 : i32
    return %arg0, %arg1 : i32, i32
  }
  func.func @transform_3(%arg0: i32, %arg1: i32) -> (i32, i32) {
    %c0_i32 = arith.constant 0 : i32
    return %arg0, %arg1 : i32, i32
  }
}

</mosaic_0001>

<llo_original>
// kernel: psf_forward.1
$region0: #{psf_forward.1}
  #allocation0 [shape = 'u32[]', space=smem, size = 0x4, offset = 0x4, fixed_abs, tag = 'smem constant byte address 0x4 - core index']
  #allocation1 [shape = 'u32[144,128]{1,0:T(1,128)}', space=vmem, size = 0x12000, scoped, tag = 'internal scratch']
  %s0 = inlined_call_operand.vmem [shape: f32[2,1,16], index: 0, kind: input, shape index: {}]
  %s1 = inlined_call_operand.vmem [shape: f32[16,8], index: 1, kind: input, shape index: {}]
  %s2 = inlined_call_operand.hbm [shape: f32[128,16], index: 2, kind: input, shape index: {}]
  %s3 = inlined_call_operand.hbm [shape: f32[64,8], index: 3, kind: output, shape index: {}]
  %s4 = sld [smem:[#allocation0]]
  $region49: #{psf_forward.1} parent=0
    _
  %s6 = ssub.s32 1, %s4
  %s7 = scalar_select 0, %s6, %s4
  $region1: #{psf_forward.1} parent=0
    #allocation2 [shape = 'u8[65536]{0}', space=vmem, size = 0x10000, scoped, tag = 'input window, operand 2']
    #allocation3 [shape = 's32[2]{0}', space=sflag, size = 0x8, scoped, tag = 'scoped memory for psf_forward.1']
    #allocation4 [shape = 's32[2]{0}', space=sflag, size = 0x8, scoped, tag = 'scoped memory for psf_forward.1']
    #allocation5 [shape = 'u8[32768]{0}', space=vmem, size = 0x8000, scoped, tag = 'output window, operand 0']
    %8 = vsyncpa [#allocation3], 0
    %s9 = scalar_lea.sflag [#allocation3], 1
    %10 = vsyncpa %s9, 0
    %11 = vsyncpa [#allocation4], 0
    %s12 = scalar_lea.sflag [#allocation4], 1
    %13 = vsyncpa %s12, 0
    loop: start=0, step=1, limit=4
    $region2: #{psf_forward.1} parent=1 // loop_pre_header
      _
    $region3: #{psf_forward.1} parent=1 // loop_header
      %s15 = sphi 0, %s19
      %p16 = scmp.ge.s32.totalorder %s15, 4
      %s22 = sphi 0, %s34
      %s23 = sphi 0, %s30
      %s24 = sphi 0, %s22
      %s25 = sphi 0, %s23
      %s26 = sphi 0, %s24
      %s27 = sphi 0, %s25
      %s35 = sphi 0, %s35
      %s37 = sphi 0, %s35
      %s38 = sphi 0, %s37
      %s52 = sphi 0, %s38
      %s56 = sphi 0, %s56
      %s58 = sphi 0, %s56
      %s59 = sphi 0, %s58
      %s73 = sphi 0, %s59
      %s81 = sphi 0, %s83
      %s84 = sphi 0, %s81
      %s85 = sphi 0, %s84
      %s101 = sphi 0, %s85
      %s109 = sphi 0, %s111
      %s112 = sphi 0, %s109
      %s113 = sphi 0, %s112
      %s129 = sphi 0, %s113
    $region4: #{psf_forward.1} parent=1 // loop_header_branch
      %18 = sbr.rel (%p16) target = $region8
    $region5: #{psf_forward.1} parent=1 // loop_body
      %s20 = ssub.s32 %s15, 1
      %s21 = ssub.s32 %s15, 2
      %s28 = sadd.s32 1, %s23
      %p29 = scmp.ge.s32.totalorder %s28, 1
      %s30 = scalar_select %p29, 0, %s28
      %s31 = sadd.s32 1, %s22
      %s32 = scalar_select %p29, %s31, %s22
      %p33 = scmp.ge.s32.totalorder %s32, 2
      %s34 = scalar_select %p33, 0, %s32
      %s36 = sadd.s32 %s35, 1
      %p39 = scmp.eq.s32.totalorder %s15, 1
      %p40 = scmp.ne.s32.totalorder %s35, %s37
      %p41 = scmp.eq.s32.totalorder %s15, 0
      %p42 = por %p40, %p41
      %p43 = scmp.ne.s32.totalorder %s35, %s37
      %p44 = scmp.eq.s32.totalorder %s20, 1
      %p45 = por %p43, %p44
      %p46 = scmp.ne.s32.totalorder %s37, %s38
      %p47 = scmp.eq.s32.totalorder %s20, 0
      %p48 = por %p46, %p47
      %p49 = scmp.ne.s32.totalorder %s37, %s38
      %p50 = scmp.eq.s32.totalorder %s21, 1
      %p51 = por %p49, %p50
      %p53 = scmp.ne.s32.totalorder %s38, %s52
      %p54 = scmp.eq.s32.totalorder %s21, 0
      %p55 = por %p53, %p54
      %s57 = sadd.s32 %s56, 1
      %p60 = scmp.eq.s32.totalorder %s15, 1
      %p61 = scmp.ne.s32.totalorder %s56, %s58
      %p62 = scmp.eq.s32.totalorder %s15, 0
      %p63 = por %p61, %p62
      %p64 = scmp.ne.s32.totalorder %s56, %s58
      %p65 = scmp.eq.s32.totalorder %s20, 1
      %p66 = por %p64, %p65
      %p67 = scmp.ne.s32.totalorder %s58, %s59
      %p68 = scmp.eq.s32.totalorder %s20, 0
      %p69 = por %p67, %p68
      %p70 = scmp.ne.s32.totalorder %s58, %s59
      %p71 = scmp.eq.s32.totalorder %s21, 1
      %p72 = por %p70, %p71
      %p74 = scmp.ne.s32.totalorder %s59, %s73
      %p75 = scmp.eq.s32.totalorder %s21, 0
      %p76 = por %p74, %p75
      %s77 = ssub.s32 %s22, %s34
      %s78 = ssub.s32 %s23, %s30
      %s79 = sor.u32 %s77, %s78
      %p80 = scmp.eq.s32.totalorder %s79, 0
      %s82 = sadd.s32 %s81, 1
      %s83 = scalar_select %p80, %s81, %s82
      %p86 = pneg %p80
      %p87 = scmp.eq.s32.totalorder %s15, 1
      %p88 = por %p86, %p87
      %p89 = scmp.ne.s32.totalorder %s81, %s84
      %p90 = scmp.eq.s32.totalorder %s15, 0
      %p91 = por %p89, %p90
      %p92 = scmp.ne.s32.totalorder %s81, %s84
      %p93 = scmp.eq.s32.totalorder %s20, 1
      %p94 = por %p92, %p93
      %p95 = scmp.ne.s32.totalorder %s84, %s85
      %p96 = scmp.eq.s32.totalorder %s20, 0
      %p97 = por %p95, %p96
      %p98 = scmp.ne.s32.totalorder %s84, %s85
      %p99 = scmp.eq.s32.totalorder %s21, 1
      %p100 = por %p98, %p99
      %p102 = scmp.ne.s32.totalorder %s85, %s101
      %p103 = scmp.eq.s32.totalorder %s21, 0
      %p104 = por %p102, %p103
      %s105 = ssub.s32 %s22, %s34
      %s106 = ssub.s32 %s23, %s30
      %s107 = sor.u32 %s105, %s106
      %p108 = scmp.eq.s32.totalorder %s107, 0
      %s110 = sadd.s32 %s109, 1
      %s111 = scalar_select %p108, %s109, %s110
      %p114 = pneg %p108
      %p115 = scmp.eq.s32.totalorder %s15, 1
      %p116 = por %p114, %p115
      %p117 = scmp.ne.s32.totalorder %s109, %s112
      %p118 = scmp.eq.s32.totalorder %s15, 0
      %p119 = por %p117, %p118
      %p120 = scmp.ne.s32.totalorder %s109, %s112
      %p121 = scmp.eq.s32.totalorder %s20, 1
      %p122 = por %p120, %p121
      %p123 = scmp.ne.s32.totalorder %s112, %s113
      %p124 = scmp.eq.s32.totalorder %s20, 0
      %p125 = por %p123, %p124
      %p126 = scmp.ne.s32.totalorder %s112, %s113
      %p127 = scmp.eq.s32.totalorder %s21, 1
      %p128 = por %p126, %p127
      %p130 = scmp.ne.s32.totalorder %s113, %s129
      %p131 = scmp.eq.s32.totalorder %s21, 0
      %p132 = por %p130, %p131
      %p133 = scmp.le.s32.totalorder 1, %s15
      %p134 = scmp.lt.s32.totalorder %s15, 3
      %p135 = pnand %p133, %p134
      %p136 = pneg %p135
      // Predicated region
      $region9: #{psf_forward.1} parent=5 // pred_check
        _
      $region10: #{psf_forward.1} parent=5 // pred_check_branch
        %138 = sbr.rel (%p135) target = $region12
      $region11: #{psf_forward.1} parent=5 // pred_region
        %s139 = ssub.s32 %s15, 1
        // Predicated region
        $region13: #{psf_forward.1} parent=11 // pred_check
          %p140 = pneg %p48
        $region14: #{psf_forward.1} parent=11 // pred_check_branch
          %142 = sbr.rel (%p140) target = $region16
        $region15: #{psf_forward.1} parent=11 // pred_region
          _
        $region16: #{psf_forward.1} parent=11 // pred_fallthru
          _
        // Predicated region
        $region17: #{psf_forward.1} parent=11 // pred_check
          %p143 = pneg %p69
        $region18: #{psf_forward.1} parent=11 // pred_check_branch
          %145 = sbr.rel (%p143) target = $region20
        $region19: #{psf_forward.1} parent=11 // pred_region
          _
        $region20: #{psf_forward.1} parent=11 // pred_fallthru
          _
      $region12: #{psf_forward.1} parent=5 // pred_fallthru
        _
      %p146 = scmp.lt.s32.totalorder %s15, 2
      // Predicated region
      $region21: #{psf_forward.1} parent=5 // pred_check
        %p147 = pneg %p146
      $region22: #{psf_forward.1} parent=5 // pred_check_branch
        %149 = sbr.rel (%p147) target = $region24
      $region23: #{psf_forward.1} parent=5 // pred_region
        // Predicated region
        $region25: #{psf_forward.1} parent=23 // pred_check
          %p150 = pneg %p91
        $region26: #{psf_forward.1} parent=23 // pred_check_branch
          %152 = sbr.rel (%p150) target = $region28
        $region27: #{psf_forward.1} parent=23 // pred_region
          %s153 = sand.u32 %s81, 1
          %s154 = scalar_lea.sflag [#allocation3], %s153
          %s155 = sand.u32 %s81, 1
          %s156 = smul.addr %s155, 64
          %s157 = scalar_lea.vmem [#allocation2], %s156
          %s158 = smul.u32 8, %s22
          %s160 = ssub.s32 1024, 1024
          %161 = vsyncadd %s154, %s160
          %s162 = sadd.s32 %s23, %s158
          %s163 = smul.addr %s162, 128
          %s164 = scalar_lea.hbm %s2, %s163
          %s165 = sshll.u32 %s157, 4
          %s166 = int_to_ptr.vmem [resolvable:$true] %s165
          %171 = dma.hbm_to_vmem [thread:$0]  %s164, 1024, %s166, %s154, 128, 128, 8
        $region28: #{psf_forward.1} parent=23 // pred_fallthru
          _
      $region24: #{psf_forward.1} parent=5 // pred_fallthru
        _
      %p172 = scmp.le.s32.totalorder 1, %s15
      %p173 = scmp.lt.s32.totalorder %s15, 3
      %p174 = pnand %p172, %p173
      %p175 = pneg %p174
      // Predicated region
      $region29: #{psf_forward.1} parent=5 // pred_check
        _
      $region30: #{psf_forward.1} parent=5 // pred_check_branch
        %177 = sbr.rel (%p174) target = $region32
      $region31: #{psf_forward.1} parent=5 // pred_region
        %s178 = ssub.s32 %s15, 1
        %s179 = sand.u32 %s84, 1
        %s180 = scalar_lea.sflag [#allocation3], %s179
        %s181 = sand.u32 %s84, 1
        %s182 = smul.addr %s181, 64
        %s183 = scalar_lea.vmem [#allocation2], %s182
        // Predicated region
        $region33: #{psf_forward.1} parent=31 // pred_check
          %p184 = pneg %p97
        $region34: #{psf_forward.1} parent=31 // pred_check_branch
          %186 = sbr.rel (%p184) target = $region36
        $region35: #{psf_forward.1} parent=31 // pred_region
          %187 = dma.done %s180, 1024
        $region36: #{psf_forward.1} parent=31 // pred_fallthru
          _
        %p188 = pneg %p48
        %p189 = pneg %p45
        %p190 = pneg %p69
        %p191 = pneg %p66
        %s192 = sand.u32 %s84, 1
        %s193 = scalar_lea.sflag [#allocation3], %s192
        %s194 = sand.u32 %s84, 1
        %s195 = smul.addr %s194, 64
        %s196 = scalar_lea.vmem [#allocation2], %s195
        %p197 = pneg %p97
        %p198 = pneg %p94
        %p199 = pneg %p125
        %p200 = pneg %p122
        %s201 = sand.u32 %s112, 1
        %s202 = scalar_lea.sflag [#allocation4], %s201
        %s203 = sand.u32 %s112, 1
        %s204 = smul.addr %s203, 32
        %s205 = scalar_lea.vmem [#allocation5], %s204
        %s206 = smul.u32 8, %s24
        %s207 = smul.u32 4, %s24
        %v208 = vld [vmem:[%s183] ss:$2 sm:$0xff]
        %s209 = scalar_lea.vmem %s183, 16 [#allocation2]
        %v210 = vld [vmem:[%s209] ss:$2 sm:$0xff]
        %s211 = scalar_lea.vmem %s183, 32 [#allocation2]
        %v212 = vld [vmem:[%s211] ss:$2 sm:$0xff]
        %s213 = scalar_lea.vmem %s183, 48 [#allocation2]
        %v214 = vld [vmem:[%s213] ss:$2 sm:$0xff]
        %v215 = vld [vmem:[%s0] sm:$0x1]
        %v217 = vlaneseq
        %v218 = vshrl.u32 %v217, 7
        %v219 = vsub.s32 0, %v218
        %v220 = vrot.slane %v215, %v219
        %v222 = vmul.f32 %v208, %v220
        %v223 = vmul.f32 %v210, %v220
        %v224 = vmul.f32 %v212, %v220
        %v225 = vmul.f32 %v214, %v220
        %s226 = scalar_lea.vmem %s183, 1 [#allocation2]
        %v227 = vld [vmem:[%s226] ss:$2 sm:$0xff]
        %s228 = scalar_lea.vmem %s183, 17 [#allocation2]
        %v229 = vld [vmem:[%s228] ss:$2 sm:$0xff]
        %s230 = scalar_lea.vmem %s183, 33 [#allocation2]
        %v231 = vld [vmem:[%s230] ss:$2 sm:$0xff]
        %s232 = scalar_lea.vmem %s183, 49 [#allocation2]
        %v233 = vld [vmem:[%s232] ss:$2 sm:$0xff]
        %s234 = scalar_lea.vmem %s0, 1
        %v235 = vld [vmem:[%s234] sm:$0x1]
        %v237 = vlaneseq
        %v238 = vshrl.u32 %v237, 7
        %v239 = vsub.s32 0, %v238
        %v240 = vrot.slane %v235, %v239
        %v242 = vmul.f32 %v227, %v240
        %v243 = vmul.f32 %v229, %v240
        %v244 = vmul.f32 %v231, %v240
        %v245 = vmul.f32 %v233, %v240
        %v246 = vadd.f32 %v222, %v242
        %v247 = vadd.f32 %v223, %v243
        %v248 = vadd.f32 %v224, %v244
        %v249 = vadd.f32 %v225, %v245
        %v250 = vld [vmem:[%s1] sm:$0xff]
        %v251 = vld [vmem:[%s1 + $0x8] sm:$0xff]
        %vm252 = vcmask 130048
        %v254 = vsel %vm252, %v246, 0
        %v257 = vsel %vm252, %v247, 0
        %v260 = vsel %vm252, %v248, 0
        %v263 = vsel %vm252, %v249, 0
        %265 = vmatprep.subr.mxu0 0.0
        %v266 = vand.u32 %v250, 4294901760
        %267 = vmatpush1.msra.mxu0 %v266
        %268 = vmatprep.subr.mxu0 0.0
        %v269 = vand.u32 %v251, 4294901760
        %270 = vmatpush1.msra.mxu0 %v269
        %271 = vmatprep.subr.mxu0 0.0
        %272 = vmatpush1.msra.mxu0 0.0
        %273 = vmatprep.subr.mxu0 0.0
        %274 = vmatpush1.msra.mxu0 0.0
        %275 = vmatprep.subr.mxu0 0.0
        %276 = vmatpush1.msra.mxu0 0.0
        %277 = vmatprep.subr.mxu0 0.0
        %278 = vmatpush1.msra.mxu0 0.0
        %279 = vmatprep.subr.mxu0 0.0
        %280 = vmatpush1.msra.mxu0 0.0
        %281 = vmatprep.subr.mxu0 0.0
        %282 = vmatpush1.msra.mxu0 0.0
        %283 = vmatprep.subr.mxu0 0.0
        %284 = vmatpush1.msra.mxu0 0.0
        %285 = vmatprep.subr.mxu0 0.0
        %286 = vmatpush1.msra.mxu0 0.0
        %287 = vmatprep.subr.mxu0 0.0
        %288 = vmatpush1.msra.mxu0 0.0
        %289 = vmatprep.subr.mxu0 0.0
        %290 = vmatpush1.msra.mxu0 0.0
        %291 = vmatprep.subr.mxu0 0.0
        %292 = vmatpush1.msra.mxu0 0.0
        %293 = vmatprep.subr.mxu0 0.0
        %294 = vmatpush1.msra.mxu0 0.0
        %295 = vmatprep.subr.mxu0 0.0
        %296 = vmatpush1.msra.mxu0 0.0
        %297 = vmatprep.subr.mxu0 0.0
        %298 = vmatpush1.msra.mxu0 0.0
        %299 = vmatprep.subr.mxu0 0.0
        %300 = vmatpush1.msra.mxu0 0.0
        %301 = vmatprep.subr.mxu0 0.0
        %302 = vmatpush1.msra.mxu0 0.0
        %303 = vmatprep.subr.mxu0 0.0
        %304 = vmatpush1.msra.mxu0 0.0
        %305 = vmatprep.subr.mxu0 0.0
        %306 = vmatpush1.msra.mxu0 0.0
        %307 = vmatprep.subr.mxu0 0.0
        %308 = vmatpush1.msra.mxu0 0.0
        %309 = vmatprep.subr.mxu0 0.0
        %310 = vmatpush1.msra.mxu0 0.0
        %311 = vmatprep.subr.mxu0 0.0
        %312 = vmatpush1.msra.mxu0 0.0
        %313 = vmatprep.subr.mxu0 0.0
        %314 = vmatpush1.msra.mxu0 0.0
        %315 = vmatprep.subr.mxu0 0.0
        %316 = vmatpush1.msra.mxu0 0.0
        %317 = vmatprep.subr.mxu0 0.0
        %318 = vmatpush1.msra.mxu0 0.0
        %319 = vmatprep.subr.mxu0 0.0
        %320 = vmatpush1.msra.mxu0 0.0
        %321 = vmatprep.subr.mxu0 0.0
        %322 = vmatpush1.msra.mxu0 0.0
        %323 = vmatprep.subr.mxu0 0.0
        %324 = vmatpush1.msra.mxu0 0.0
        %325 = vmatprep.subr.mxu0 0.0
        %326 = vmatpush1.msra.mxu0 0.0
        %327 = vmatprep.subr.mxu0 0.0
        %328 = vmatpush1.msra.mxu0 0.0
        %329 = vmatprep.subr.mxu0 0.0
        %330 = vmatpush1.msra.mxu0 0.0
        %331 = vmatprep.mubr.f32.mxu0 0.0
        %v332 = vand.u32 %v254, 4294901760
        %v333 = vsub.f32 %v254, %v332
        %v334 = vand.u32 %v333, 4294901760
        %v335 = vsub.f32 %v333, %v334
        %v336 = vand.u32 %v335, 4294901760
        %337 = vmatmul.mubr.f32.gmra.mrb[0].mxu0 %v336
        %v338 = vpop.f32.mrb[0].mxu0
        %v339 = vadd.f32 0.0, %v338
        %v340 = vpop.f32.mrb[0].mxu0
        %341 = vmatprep.mubr.f32.mxu0 0.0
        %v342 = vand.u32 %v257, 4294901760
        %v343 = vsub.f32 %v257, %v342
        %v344 = vand.u32 %v343, 4294901760
        %v345 = vsub.f32 %v343, %v344
        %v346 = vand.u32 %v345, 4294901760
        %347 = vmatmul.mubr.f32.gmra.mrb[0].mxu0 %v346
        %v348 = vpop.f32.mrb[0].mxu0
        %v349 = vadd.f32 0.0, %v348
        %v350 = vpop.f32.mrb[0].mxu0
        %351 = vmatprep.mubr.f32.mxu0 0.0
        %v352 = vand.u32 %v260, 4294901760
        %v353 = vsub.f32 %v260, %v352
        %v354 = vand.u32 %v353, 4294901760
        %v355 = vsub.f32 %v353, %v354
        %v356 = vand.u32 %v355, 4294901760
        %357 = vmatmul.mubr.f32.gmra.mrb[0].mxu0 %v356
        %v358 = vpop.f32.mrb[0].mxu0
        %v359 = vadd.f32 0.0, %v358
        %v360 = vpop.f32.mrb[0].mxu0
        %361 = vmatprep.mubr.f32.mxu0 0.0
        %v362 = vand.u32 %v263, 4294901760
        %v363 = vsub.f32 %v263, %v362
        %v364 = vand.u32 %v363, 4294901760
        %v365 = vsub.f32 %v363, %v364
        %v366 = vand.u32 %v365, 4294901760
        %367 = vmatmul.mubr.f32.gmra.mrb[0].mxu0 %v366
        %v368 = vpop.f32.mrb[0].mxu0
        %v369 = vadd.f32 0.0, %v368
        %v370 = vpop.f32.mrb[0].mxu0
        %371 = vdwg.mxu0
        %372 = vmatprep.subr.mxu0 0.0
        %v373 = vand.u32 %v250, 4294901760
        %v374 = vsub.f32 %v250, %v373
        %v375 = vand.u32 %v374, 4294901760
        %v376 = vsub.f32 %v374, %v375
        %v377 = vand.u32 %v376, 4294901760
        %378 = vmatpush1.msra.mxu0 %v377
        %379 = vmatprep.subr.mxu0 0.0
        %v380 = vand.u32 %v251, 4294901760
        %v381 = vsub.f32 %v251, %v380
        %v382 = vand.u32 %v381, 4294901760
        %v383 = vsub.f32 %v381, %v382
        %v384 = vand.u32 %v383, 4294901760
        %385 = vmatpush1.msra.mxu0 %v384
        %386 = vmatprep.subr.mxu0 0.0
        %387 = vmatpush1.msra.mxu0 0.0
        %388 = vmatprep.subr.mxu0 0.0
        %389 = vmatpush1.msra.mxu0 0.0
        %390 = vmatprep.subr.mxu0 0.0
        %391 = vmatpush1.msra.mxu0 0.0
        %392 = vmatprep.subr.mxu0 0.0
        %393 = vmatpush1.msra.mxu0 0.0
        %394 = vmatprep.subr.mxu0 0.0
        %395 = vmatpush1.msra.mxu0 0.0
        %396 = vmatprep.subr.mxu0 0.0
        %397 = vmatpush1.msra.mxu0 0.0
        %398 = vmatprep.subr.mxu0 0.0
        %399 = vmatpush1.msra.mxu0 0.0
        %400 = vmatprep.subr.mxu0 0.0
        %401 = vmatpush1.msra.mxu0 0.0
        %402 = vmatprep.subr.mxu0 0.0
        %403 = vmatpush1.msra.mxu0 0.0
        %404 = vmatprep.subr.mxu0 0.0
        %405 = vmatpush1.msra.mxu0 0.0
        %406 = vmatprep.subr.mxu0 0.0
        %407 = vmatpush1.msra.mxu0 0.0
        %408 = vmatprep.subr.mxu0 0.0
        %409 = vmatpush1.msra.mxu0 0.0
        %410 = vmatprep.subr.mxu0 0.0
        %411 = vmatpush1.msra.mxu0 0.0
        %412 = vmatprep.subr.mxu0 0.0
        %413 = vmatpush1.msra.mxu0 0.0
        %414 = vmatprep.subr.mxu0 0.0
        %415 = vmatpush1.msra.mxu0 0.0
        %416 = vmatprep.subr.mxu0 0.0
        %417 = vmatpush1.msra.mxu0 0.0
        %418 = vmatprep.subr.mxu0 0.0
        %419 = vmatpush1.msra.mxu0 0.0
        %420 = vmatprep.subr.mxu0 0.0
        %421 = vmatpush1.msra.mxu0 0.0
        %422 = vmatprep.subr.mxu0 0.0
        %423 = vmatpush1.msra.mxu0 0.0
        %424 = vmatprep.subr.mxu0 0.0
        %425 = vmatpush1.msra.mxu0 0.0
        %426 = vmatprep.subr.mxu0 0.0
        %427 = vmatpush1.msra.mxu0 0.0
        %428 = vmatprep.subr.mxu0 0.0
        %429 = vmatpush1.msra.mxu0 0.0
        %430 = vmatprep.subr.mxu0 0.0
        %431 = vmatpush1.msra.mxu0 0.0
        %432 = vmatprep.subr.mxu0 0.0
        %433 = vmatpush1.msra.mxu0 0.0
        %434 = vmatprep.subr.mxu0 0.0
        %435 = vmatpush1.msra.mxu0 0.0
        %436 = vmatprep.subr.mxu0 0.0
        %437 = vmatpush1.msra.mxu0 0.0
        %438 = vmatprep.subr.mxu0 0.0
        %439 = vmatpush1.msra.mxu0 0.0
        %440 = vmatprep.subr.mxu0 0.0
        %441 = vmatpush1.msra.mxu0 0.0
        %442 = vmatprep.subr.mxu0 0.0
        %443 = vmatpush1.msra.mxu0 0.0
        %444 = vmatprep.subr.mxu0 0.0
        %445 = vmatpush1.msra.mxu0 0.0
        %446 = vmatprep.mubr.f32.mxu0 0.0
        %v447 = vand.u32 %v254, 4294901760
        %448 = vmatmul.mubr.f32.gmra.mrb[0].mxu0 %v447
        %v449 = vpop.f32.mrb[0].mxu0
        %v450 = vadd.f32 %v339, %v449
        %v451 = vpop.f32.mrb[0].mxu0
        %452 = vmatprep.mubr.f32.mxu0 0.0
        %v453 = vand.u32 %v257, 4294901760
        %454 = vmatmul.mubr.f32.gmra.mrb[0].mxu0 %v453
        %v455 = vpop.f32.mrb[0].mxu0
        %v456 = vadd.f32 %v349, %v455
        %v457 = vpop.f32.mrb[0].mxu0
        %458 = vmatprep.mubr.f32.mxu0 0.0
        %v459 = vand.u32 %v260, 4294901760
        %460 = vmatmul.mubr.f32.gmra.mrb[0].mxu0 %v459
        %v461 = vpop.f32.mrb[0].mxu0
        %v462 = vadd.f32 %v359, %v461
        %v463 = vpop.f32.mrb[0].mxu0
        %464 = vmatprep.mubr.f32.mxu0 0.0
        %v465 = vand.u32 %v263, 4294901760
        %466 = vmatmul.mubr.f32.gmra.mrb[0].mxu0 %v465
        %v467 = vpop.f32.mrb[0].mxu0
        %v468 = vadd.f32 %v369, %v467
        %v469 = vpop.f32.mrb[0].mxu0
        %470 = vdwg.mxu0
        %471 = vmatprep.subr.mxu0 0.0
        %v472 = vand.u32 %v250, 4294901760
        %v473 = vsub.f32 %v250, %v472
        %474 = vmatpush1.msra.mxu0 %v473
        %475 = vmatprep.subr.mxu0 0.0
        %v476 = vand.u32 %v251, 4294901760
        %v477 = vsub.f32 %v251, %v476
        %478 = vmatpush1.msra.mxu0 %v477
        %479 = vmatprep.subr.mxu0 0.0
        %480 = vmatpush1.msra.mxu0 0.0
        %481 = vmatprep.subr.mxu0 0.0
        %482 = vmatpush1.msra.mxu0 0.0
        %483 = vmatprep.subr.mxu0 0.0
        %484 = vmatpush1.msra.mxu0 0.0
        %485 = vmatprep.subr.mxu0 0.0
        %486 = vmatpush1.msra.mxu0 0.0
        %487 = vmatprep.subr.mxu0 0.0
        %488 = vmatpush1.msra.mxu0 0.0
        %489 = vmatprep.subr.mxu0 0.0
        %490 = vmatpush1.msra.mxu0 0.0
        %491 = vmatprep.subr.mxu0 0.0
        %492 = vmatpush1.msra.mxu0 0.0
        %493 = vmatprep.subr.mxu0 0.0
        %494 = vmatpush1.msra.mxu0 0.0
        %495 = vmatprep.subr.mxu0 0.0
        %496 = vmatpush1.msra.mxu0 0.0
        %497 = vmatprep.subr.mxu0 0.0
        %498 = vmatpush1.msra.mxu0 0.0
        %499 = vmatprep.subr.mxu0 0.0
        %500 = vmatpush1.msra.mxu0 0.0
        %501 = vmatprep.subr.mxu0 0.0
        %502 = vmatpush1.msra.mxu0 0.0
        %503 = vmatprep.subr.mxu0 0.0
        %504 = vmatpush1.msra.mxu0 0.0
        %505 = vmatprep.subr.mxu0 0.0
        %506 = vmatpush1.msra.mxu0 0.0
        %507 = vmatprep.subr.mxu0 0.0
        %508 = vmatpush1.msra.mxu0 0.0
        %509 = vmatprep.subr.mxu0 0.0
        %510 = vmatpush1.msra.mxu0 0.0
        %511 = vmatprep.subr.mxu0 0.0
        %512 = vmatpush1.msra.mxu0 0.0
        %513 = vmatprep.subr.mxu0 0.0
        %514 = vmatpush1.msra.mxu0 0.0
        %515 = vmatprep.subr.mxu0 0.0
        %516 = vmatpush1.msra.mxu0 0.0
        %517 = vmatprep.subr.mxu0 0.0
        %518 = vmatpush1.msra.mxu0 0.0
        %519 = vmatprep.subr.mxu0 0.0
        %520 = vmatpush1.msra.mxu0 0.0
        %521 = vmatprep.subr.mxu0 0.0
        %522 = vmatpush1.msra.mxu0 0.0
        %523 = vmatprep.subr.mxu0 0.0
        %524 = vmatpush1.msra.mxu0 0.0
        %525 = vmatprep.subr.mxu0 0.0
        %526 = vmatpush1.msra.mxu0 0.0
        %527 = vmatprep.subr.mxu0 0.0
        %528 = vmatpush1.msra.mxu0 0.0
        %529 = vmatprep.subr.mxu0 0.0
        %530 = vmatpush1.msra.mxu0 0.0
        %531 = vmatprep.subr.mxu0 0.0
        %532 = vmatpush1.msra.mxu0 0.0
        %533 = vmatprep.subr.mxu0 0.0
        %534 = vmatpush1.msra.mxu0 0.0
        %535 = vmatprep.subr.mxu0 0.0
        %536 = vmatpush1.msra.mxu0 0.0
        %537 = vmatprep.subr.mxu0 0.0
        %538 = vmatpush1.msra.mxu0 0.0
        %539 = vmatprep.mubr.f32.mxu0 0.0
        %v540 = vand.u32 %v254, 4294901760
        %v541 = vsub.f32 %v254, %v540
        %542 = vmatmul.mubr.f32.gmra.mrb[0].mxu0 %v541
        %v543 = vpop.f32.mrb[0].mxu0
        %v544 = vadd.f32 %v450, %v543
        %v545 = vpop.f32.mrb[0].mxu0
        %546 = vmatprep.mubr.f32.mxu0 0.0
        %v547 = vand.u32 %v257, 4294901760
        %v548 = vsub.f32 %v257, %v547
        %549 = vmatmul.mubr.f32.gmra.mrb[0].mxu0 %v548
        %v550 = vpop.f32.mrb[0].mxu0
        %v551 = vadd.f32 %v456, %v550
        %v552 = vpop.f32.mrb[0].mxu0
        %553 = vmatprep.mubr.f32.mxu0 0.0
        %v554 = vand.u32 %v260, 4294901760
        %v555 = vsub.f32 %v260, %v554
        %556 = vmatmul.mubr.f32.gmra.mrb[0].mxu0 %v555
        %v557 = vpop.f32.mrb[0].mxu0
        %v558 = vadd.f32 %v462, %v557
        %v559 = vpop.f32.mrb[0].mxu0
        %560 = vmatprep.mubr.f32.mxu0 0.0
        %v561 = vand.u32 %v263, 4294901760
        %v562 = vsub.f32 %v263, %v561
        %563 = vmatmul.mubr.f32.gmra.mrb[0].mxu0 %v562
        %v564 = vpop.f32.mrb[0].mxu0
        %v565 = vadd.f32 %v468, %v564
        %v566 = vpop.f32.mrb[0].mxu0
        %567 = vdwg.mxu0
        %568 = vmatprep.subr.mxu0 0.0
        %v569 = vand.u32 %v250, 4294901760
        %570 = vmatpush1.msra.mxu0 %v569
        %571 = vmatprep.subr.mxu0 0.0
        %v572 = vand.u32 %v251, 4294901760
        %573 = vmatpush1.msra.mxu0 %v572
        %574 = vmatprep.subr.mxu0 0.0
        %575 = vmatpush1.msra.mxu0 0.0
        %576 = vmatprep.subr.mxu0 0.0
        %577 = vmatpush1.msra.mxu0 0.0
        %578 = vmatprep.subr.mxu0 0.0
        %579 = vmatpush1.msra.mxu0 0.0
        %580 = vmatprep.subr.mxu0 0.0
        %581 = vmatpush1.msra.mxu0 0.0
        %582 = vmatprep.subr.mxu0 0.0
        %583 = vmatpush1.msra.mxu0 0.0
        %584 = vmatprep.subr.mxu0 0.0
        %585 = vmatpush1.msra.mxu0 0.0
        %586 = vmatprep.subr.mxu0 0.0
        %587 = vmatpush1.msra.mxu0 0.0
        %588 = vmatprep.subr.mxu0 0.0
        %589 = vmatpush1.msra.mxu0 0.0
        %590 = vmatprep.subr.mxu0 0.0
        %591 = vmatpush1.msra.mxu0 0.0
        %592 = vmatprep.subr.mxu0 0.0
        %593 = vmatpush1.msra.mxu0 0.0
        %594 = vmatprep.subr.mxu0 0.0
        %595 = vmatpush1.msra.mxu0 0.0
        %596 = vmatprep.subr.mxu0 0.0
        %597 = vmatpush1.msra.mxu0 0.0
        %598 = vmatprep.subr.mxu0 0.0
        %599 = vmatpush1.msra.mxu0 0.0
        %600 = vmatprep.subr.mxu0 0.0
        %601 = vmatpush1.msra.mxu0 0.0
        %602 = vmatprep.subr.mxu0 0.0
        %603 = vmatpush1.msra.mxu0 0.0
        %604 = vmatprep.subr.mxu0 0.0
        %605 = vmatpush1.msra.mxu0 0.0
        %606 = vmatprep.subr.mxu0 0.0
        %607 = vmatpush1.msra.mxu0 0.0
        %608 = vmatprep.subr.mxu0 0.0
        %609 = vmatpush1.msra.mxu0 0.0
        %610 = vmatprep.subr.mxu0 0.0
        %611 = vmatpush1.msra.mxu0 0.0
        %612 = vmatprep.subr.mxu0 0.0
        %613 = vmatpush1.msra.mxu0 0.0
        %614 = vmatprep.subr.mxu0 0.0
        %615 = vmatpush1.msra.mxu0 0.0
        %616 = vmatprep.subr.mxu0 0.0
        %617 = vmatpush1.msra.mxu0 0.0
        %618 = vmatprep.subr.mxu0 0.0
        %619 = vmatpush1.msra.mxu0 0.0
        %620 = vmatprep.subr.mxu0 0.0
        %621 = vmatpush1.msra.mxu0 0.0
        %622 = vmatprep.subr.mxu0 0.0
        %623 = vmatpush1.msra.mxu0 0.0
        %624 = vmatprep.subr.mxu0 0.0
        %625 = vmatpush1.msra.mxu0 0.0
        %626 = vmatprep.subr.mxu0 0.0
        %627 = vmatpush1.msra.mxu0 0.0
        %628 = vmatprep.subr.mxu0 0.0
        %629 = vmatpush1.msra.mxu0 0.0
        %630 = vmatprep.subr.mxu0 0.0
        %631 = vmatpush1.msra.mxu0 0.0
        %632 = vmatprep.subr.mxu0 0.0
        %633 = vmatpush1.msra.mxu0 0.0
        %634 = vmatprep.mubr.f32.mxu0 0.0
        %v635 = vand.u32 %v254, 4294901760
        %v636 = vsub.f32 %v254, %v635
        %v637 = vand.u32 %v636, 4294901760
        %638 = vmatmul.mubr.f32.gmra.mrb[0].mxu0 %v637
        %v639 = vpop.f32.mrb[0].mxu0
        %v640 = vadd.f32 %v544, %v639
        %v641 = vpop.f32.mrb[0].mxu0
        %642 = vmatprep.mubr.f32.mxu0 0.0
        %v643 = vand.u32 %v257, 4294901760
        %v644 = vsub.f32 %v257, %v643
        %v645 = vand.u32 %v644, 4294901760
        %646 = vmatmul.mubr.f32.gmra.mrb[0].mxu0 %v645
        %v647 = vpop.f32.mrb[0].mxu0
        %v648 = vadd.f32 %v551, %v647
        %v649 = vpop.f32.mrb[0].mxu0
        %650 = vmatprep.mubr.f32.mxu0 0.0
        %v651 = vand.u32 %v260, 4294901760
        %v652 = vsub.f32 %v260, %v651
        %v653 = vand.u32 %v652, 4294901760
        %654 = vmatmul.mubr.f32.gmra.mrb[0].mxu0 %v653
        %v655 = vpop.f32.mrb[0].mxu0
        %v656 = vadd.f32 %v558, %v655
        %v657 = vpop.f32.mrb[0].mxu0
        %658 = vmatprep.mubr.f32.mxu0 0.0
        %v659 = vand.u32 %v263, 4294901760
        %v660 = vsub.f32 %v263, %v659
        %v661 = vand.u32 %v660, 4294901760
        %662 = vmatmul.mubr.f32.gmra.mrb[0].mxu0 %v661
        %v663 = vpop.f32.mrb[0].mxu0
        %v664 = vadd.f32 %v565, %v663
        %v665 = vpop.f32.mrb[0].mxu0
        %666 = vdwg.mxu0
        %667 = vmatprep.subr.mxu0 0.0
        %v668 = vand.u32 %v250, 4294901760
        %v669 = vsub.f32 %v250, %v668
        %v670 = vand.u32 %v669, 4294901760
        %671 = vmatpush1.msra.mxu0 %v670
        %672 = vmatprep.subr.mxu0 0.0
        %v673 = vand.u32 %v251, 4294901760
        %v674 = vsub.f32 %v251, %v673
        %v675 = vand.u32 %v674, 4294901760
        %676 = vmatpush1.msra.mxu0 %v675
        %677 = vmatprep.subr.mxu0 0.0
        %678 = vmatpush1.msra.mxu0 0.0
        %679 = vmatprep.subr.mxu0 0.0
        %680 = vmatpush1.msra.mxu0 0.0
        %681 = vmatprep.subr.mxu0 0.0
        %682 = vmatpush1.msra.mxu0 0.0
        %683 = vmatprep.subr.mxu0 0.0
        %684 = vmatpush1.msra.mxu0 0.0
        %685 = vmatprep.subr.mxu0 0.0
        %686 = vmatpush1.msra.mxu0 0.0
        %687 = vmatprep.subr.mxu0 0.0
        %688 = vmatpush1.msra.mxu0 0.0
        %689 = vmatprep.subr.mxu0 0.0
        %690 = vmatpush1.msra.mxu0 0.0
        %691 = vmatprep.subr.mxu0 0.0
        %692 = vmatpush1.msra.mxu0 0.0
        %693 = vmatprep.subr.mxu0 0.0
        %694 = vmatpush1.msra.mxu0 0.0
        %695 = vmatprep.subr.mxu0 0.0
        %696 = vmatpush1.msra.mxu0 0.0
        %697 = vmatprep.subr.mxu0 0.0
        %698 = vmatpush1.msra.mxu0 0.0
        %699 = vmatprep.subr.mxu0 0.0
        %700 = vmatpush1.msra.mxu0 0.0
        %701 = vmatprep.subr.mxu0 0.0
        %702 = vmatpush1.msra.mxu0 0.0
        %703 = vmatprep.subr.mxu0 0.0
        %704 = vmatpush1.msra.mxu0 0.0
        %705 = vmatprep.subr.mxu0 0.0
        %706 = vmatpush1.msra.mxu0 0.0
        %707 = vmatprep.subr.mxu0 0.0
        %708 = vmatpush1.msra.mxu0 0.0
        %709 = vmatprep.subr.mxu0 0.0
        %710 = vmatpush1.msra.mxu0 0.0
        %711 = vmatprep.subr.mxu0 0.0
        %712 = vmatpush1.msra.mxu0 0.0
        %713 = vmatprep.subr.mxu0 0.0
        %714 = vmatpush1.msra.mxu0 0.0
        %715 = vmatprep.subr.mxu0 0.0
        %716 = vmatpush1.msra.mxu0 0.0
        %717 = vmatprep.subr.mxu0 0.0
        %718 = vmatpush1.msra.mxu0 0.0
        %719 = vmatprep.subr.mxu0 0.0
        %720 = vmatpush1.msra.mxu0 0.0
        %721 = vmatprep.subr.mxu0 0.0
        %722 = vmatpush1.msra.mxu0 0.0
        %723 = vmatprep.subr.mxu0 0.0
        %724 = vmatpush1.msra.mxu0 0.0
        %725 = vmatprep.subr.mxu0 0.0
        %726 = vmatpush1.msra.mxu0 0.0
        %727 = vmatprep.subr.mxu0 0.0
        %728 = vmatpush1.msra.mxu0 0.0
        %729 = vmatprep.subr.mxu0 0.0
        %730 = vmatpush1.msra.mxu0 0.0
        %731 = vmatprep.subr.mxu0 0.0
        %732 = vmatpush1.msra.mxu0 0.0
        %733 = vmatprep.subr.mxu0 0.0
        %734 = vmatpush1.msra.mxu0 0.0
        %735 = vmatprep.subr.mxu0 0.0
        %736 = vmatpush1.msra.mxu0 0.0
        %737 = vmatprep.mubr.f32.mxu0 0.0
        %v738 = vand.u32 %v254, 4294901760
        %739 = vmatmul.mubr.f32.gmra.mrb[0].mxu0 %v738
        %v740 = vpop.f32.mrb[0].mxu0
        %v741 = vadd.f32 %v640, %v740
        %v742 = vpop.f32.mrb[0].mxu0
        %743 = vmatprep.mubr.f32.mxu0 0.0
        %v744 = vand.u32 %v257, 4294901760
        %745 = vmatmul.mubr.f32.gmra.mrb[0].mxu0 %v744
        %v746 = vpop.f32.mrb[0].mxu0
        %v747 = vadd.f32 %v648, %v746
        %v748 = vpop.f32.mrb[0].mxu0
        %749 = vmatprep.mubr.f32.mxu0 0.0
        %v750 = vand.u32 %v260, 4294901760
        %751 = vmatmul.mubr.f32.gmra.mrb[0].mxu0 %v750
        %v752 = vpop.f32.mrb[0].mxu0
        %v753 = vadd.f32 %v656, %v752
        %v754 = vpop.f32.mrb[0].mxu0
        %755 = vmatprep.mubr.f32.mxu0 0.0
        %v756 = vand.u32 %v263, 4294901760
        %757 = vmatmul.mubr.f32.gmra.mrb[0].mxu0 %v756
        %v758 = vpop.f32.mrb[0].mxu0
        %v759 = vadd.f32 %v664, %v758
        %v760 = vpop.f32.mrb[0].mxu0
        %761 = vdwg.mxu0
        %762 = vmatprep.subr.mxu0 0.0
        %v763 = vand.u32 %v250, 4294901760
        %764 = vmatpush1.msra.mxu0 %v763
        %765 = vmatprep.subr.mxu0 0.0
        %v766 = vand.u32 %v251, 4294901760
        %767 = vmatpush1.msra.mxu0 %v766
        %768 = vmatprep.subr.mxu0 0.0
        %769 = vmatpush1.msra.mxu0 0.0
        %770 = vmatprep.subr.mxu0 0.0
        %771 = vmatpush1.msra.mxu0 0.0
        %772 = vmatprep.subr.mxu0 0.0
        %773 = vmatpush1.msra.mxu0 0.0
        %774 = vmatprep.subr.mxu0 0.0
        %775 = vmatpush1.msra.mxu0 0.0
        %776 = vmatprep.subr.mxu0 0.0
        %777 = vmatpush1.msra.mxu0 0.0
        %778 = vmatprep.subr.mxu0 0.0
        %779 = vmatpush1.msra.mxu0 0.0
        %780 = vmatprep.subr.mxu0 0.0
        %781 = vmatpush1.msra.mxu0 0.0
        %782 = vmatprep.subr.mxu0 0.0
        %783 = vmatpush1.msra.mxu0 0.0
        %784 = vmatprep.subr.mxu0 0.0
        %785 = vmatpush1.msra.mxu0 0.0
        %786 = vmatprep.subr.mxu0 0.0
        %787 = vmatpush1.msra.mxu0 0.0
        %788 = vmatprep.subr.mxu0 0.0
        %789 = vmatpush1.msra.mxu0 0.0
        %790 = vmatprep.subr.mxu0 0.0
        %791 = vmatpush1.msra.mxu0 0.0
        %792 = vmatprep.subr.mxu0 0.0
        %793 = vmatpush1.msra.mxu0 0.0
        %794 = vmatprep.subr.mxu0 0.0
        %795 = vmatpush1.msra.mxu0 0.0
        %796 = vmatprep.subr.mxu0 0.0
        %797 = vmatpush1.msra.mxu0 0.0
        %798 = vmatprep.subr.mxu0 0.0
        %799 = vmatpush1.msra.mxu0 0.0
        %800 = vmatprep.subr.mxu0 0.0
        %801 = vmatpush1.msra.mxu0 0.0
        %802 = vmatprep.subr.mxu0 0.0
        %803 = vmatpush1.msra.mxu0 0.0
        %804 = vmatprep.subr.mxu0 0.0
        %805 = vmatpush1.msra.mxu0 0.0
        %806 = vmatprep.subr.mxu0 0.0
        %807 = vmatpush1.msra.mxu0 0.0
        %808 = vmatprep.subr.mxu0 0.0
        %809 = vmatpush1.msra.mxu0 0.0
        %810 = vmatprep.subr.mxu0 0.0
        %811 = vmatpush1.msra.mxu0 0.0
        %812 = vmatprep.subr.mxu0 0.0
        %813 = vmatpush1.msra.mxu0 0.0
        %814 = vmatprep.subr.mxu0 0.0
        %815 = vmatpush1.msra.mxu0 0.0
        %816 = vmatprep.subr.mxu0 0.0
        %817 = vmatpush1.msra.mxu0 0.0
        %818 = vmatprep.subr.mxu0 0.0
        %819 = vmatpush1.msra.mxu0 0.0
        %820 = vmatprep.subr.mxu0 0.0
        %821 = vmatpush1.msra.mxu0 0.0
        %822 = vmatprep.subr.mxu0 0.0
        %823 = vmatpush1.msra.mxu0 0.0
        %824 = vmatprep.subr.mxu0 0.0
        %825 = vmatpush1.msra.mxu0 0.0
        %826 = vmatprep.subr.mxu0 0.0
        %827 = vmatpush1.msra.mxu0 0.0
        %828 = vmatprep.mubr.f32.mxu0 0.0
        %v829 = vand.u32 %v254, 4294901760
        %830 = vmatmul.mubr.f32.gmra.mrb[0].mxu0 %v829
        %v831 = vpop.f32.mrb[0].mxu0
        %v832 = vadd.f32 %v741, %v831
        %v833 = vpop.f32.mrb[0].mxu0
        %834 = vmatprep.mubr.f32.mxu0 0.0
        %v835 = vand.u32 %v257, 4294901760
        %836 = vmatmul.mubr.f32.gmra.mrb[0].mxu0 %v835
        %v837 = vpop.f32.mrb[0].mxu0
        %v838 = vadd.f32 %v747, %v837
        %v839 = vpop.f32.mrb[0].mxu0
        %840 = vmatprep.mubr.f32.mxu0 0.0
        %v841 = vand.u32 %v260, 4294901760
        %842 = vmatmul.mubr.f32.gmra.mrb[0].mxu0 %v841
        %v843 = vpop.f32.mrb[0].mxu0
        %v844 = vadd.f32 %v753, %v843
        %v845 = vpop.f32.mrb[0].mxu0
        %846 = vmatprep.mubr.f32.mxu0 0.0
        %v847 = vand.u32 %v263, 4294901760
        %848 = vmatmul.mubr.f32.gmra.mrb[0].mxu0 %v847
        %v849 = vpop.f32.mrb[0].mxu0
        %v850 = vadd.f32 %v759, %v849
        %v851 = vpop.f32.mrb[0].mxu0
        %852 = vdwg.mxu0
        %vm853 = vcmask 64512
        %854 = vst.msk [vmem:[%s205] sm:$0xff] %vm853, %v832
        %855 = vst.msk [vmem:[%s205 + $0x8] sm:$0xff] %vm853, %v838
        %856 = vst.msk [vmem:[%s205 + $0x10] sm:$0xff] %vm853, %v844
        %857 = vst.msk [vmem:[%s205 + $0x18] sm:$0xff] %vm853, %v850
        %s858 = sand.u32 %s112, 1
        %s859 = scalar_lea.sflag [#allocation4], %s858
        %s860 = sand.u32 %s112, 1
        %s861 = smul.addr %s860, 32
        %s862 = scalar_lea.vmem [#allocation5], %s861
        // Predicated region
        $region37: #{psf_forward.1} parent=31 // pred_check
          %p863 = pneg %p122
        $region38: #{psf_forward.1} parent=31 // pred_check_branch
          %865 = sbr.rel (%p863) target = $region40
        $region39: #{psf_forward.1} parent=31 // pred_region
          %s866 = smul.u32 4, %s24
          %s868 = ssub.s32 512, 512
          %869 = vsyncadd %s859, %s868
          %s870 = sadd.s32 %s25, %s866
          %s871 = smul.addr %s870, 128
          %s872 = scalar_lea.hbm %s3, %s871
          %s873 = sshll.u32 %s862, 4
          %s874 = int_to_ptr.vmem [resolvable:$true] %s873
          %879 = dma.vmem_to_hbm [thread:$0]  %s874, 512, %s872, %s859, 128, 128, 8
        $region40: #{psf_forward.1} parent=31 // pred_fallthru
          _
      $region32: #{psf_forward.1} parent=5 // pred_fallthru
        _
      %p880 = scmp.le.s32.totalorder 2, %s15
      // Predicated region
      $region41: #{psf_forward.1} parent=5 // pred_check
        %p881 = pneg %p880
      $region42: #{psf_forward.1} parent=5 // pred_check_branch
        %883 = sbr.rel (%p881) target = $region44
      $region43: #{psf_forward.1} parent=5 // pred_region
        %s884 = ssub.s32 %s15, 2
        // Predicated region
        $region45: #{psf_forward.1} parent=43 // pred_check
          %p885 = pneg %p128
        $region46: #{psf_forward.1} parent=43 // pred_check_branch
          %887 = sbr.rel (%p885) target = $region48
        $region47: #{psf_forward.1} parent=43 // pred_region
          %s888 = sand.u32 %s113, 1
          %s889 = scalar_lea.sflag [#allocation4], %s888
          %s890 = sand.u32 %s113, 1
          %s891 = smul.addr %s890, 32
          %s892 = scalar_lea.vmem [#allocation5], %s891
          %893 = dma.done %s889, 512
        $region48: #{psf_forward.1} parent=43 // pred_fallthru
          _
      $region44: #{psf_forward.1} parent=5 // pred_fallthru
        _
    $region6: #{psf_forward.1} parent=1 // loop_footer
      %s19 = sadd.s32 1, %s15
    $region7: #{psf_forward.1} parent=1 // loop_footer_branch
      %14 = sbr.rel target = $region3
    $region8: #{psf_forward.1} parent=1 // loop_exit
      _
    %894 = vsyncpa [#allocation3], 1
    %s895 = scalar_lea.sflag [#allocation3], 1
    %896 = vsyncpa %s895, 1
    %897 = vsyncpa [#allocation4], 1
    %s898 = scalar_lea.sflag [#allocation4], 1
    %899 = vsyncpa %s898, 1

</llo_original>
